<compile_context>
chip_gen: v6e
topology: v6e:2x2x1
jax: 0.10.0
libtpu: 0.0.40
codegen_flags: <defaults>
</compile_context>

<pallas_src>
import math
import functools

import jax
import jax.numpy as jnp
from jax.experimental import pallas as pl
from jax.experimental.pallas import tpu as pltpu


def _round_up(x, m):
    return (x + m - 1) // m * m


def _apply_act(x, activation):
    if activation == "relu":
        return jnp.maximum(x, 0.0)
    if activation == "sigmoid":
        return jax.nn.sigmoid(x)
    if activation == "gelu":
        # tanh approximation — identical formula to the reference GELU module
        return jax.nn.gelu(x, approximate=True)
    if activation == "linear":
        return x
    # TODO(synk): 'prelu' (learnable slope) not implemented.
    raise NotImplementedError(activation)


def _resident_spec(shape, index_map):
    """Grid-constant, full-extent block: single-buffer it (fetched exactly once)."""
    try:
        return pl.BlockSpec(shape, index_map, pipeline_mode=pl.Buffered(1))
    except TypeError:  # older JAX without pipeline_mode: default double-buffering
        return pl.BlockSpec(shape, index_map)


def _fused_mlp_kernel(x_ref, *refs, num_layers, activation, mxu_dtype):
    """o = act(... act(act(x @ W0 + b0) @ W1 + b1) ...) for one M-tile.

    refs = (w0, b0, w1, b1, ..., o).  x_ref: (TM, Kpad0); w_l: (Kpad_l, Npad_l);
    b_l: (1, Npad_l) f32; o: (TM, Npad_last).  The layer loop is unrolled (L is
    small and static); inter-layer activations never leave vregs/VMEM.
    """
    o_ref = refs[-1]
    w_refs = refs[0:-1:2]
    b_refs = refs[1:-1:2]
    bf16_epilogue = (mxu_dtype == jnp.bfloat16) and activation in ("gelu", "sigmoid")

    h = x_ref[...]
    for layer in range(num_layers):
        acc = jnp.dot(h.astype(mxu_dtype), w_refs[layer][...].astype(mxu_dtype),
                      preferred_element_type=jnp.float32)
        acc = acc + b_refs[layer][...]          # (1, Npad_l) f32 broadcasts over rows
        last = layer == num_layers - 1
        if bf16_epilogue and not last:
            # The result feeds the next bf16 matmul anyway; bf16 EUP/VPU run at
            # 2x f32 on v6e/v7x and the EUP (tanh/exp) is the binding slot at
            # ~128-wide layers.  (Pass mxu_dtype=f32 on v5e: no bf16 VPU/EUP.)
            acc = acc.astype(jnp.bfloat16)
        h = _apply_act(acc, activation)
    o_ref[...] = h.astype(o_ref.dtype)


def fused_mlp_pallas(x2d, w_pads, b_pads, activation, n_out,
                     mxu_dtype=jnp.bfloat16):
    """Run the fused MLP.

    x2d:     (M, K) f32
    w_pads:  list of (Kpad_l, Npad_l) padded weights (padding rows/cols == 0!)
    b_pads:  list of (1, Npad_l) f32 padded biases
    Returns (M, n_out).
    """
    M, K = x2d.shape
    num_layers = len(w_pads)
    kpads = [w.shape[0] for w in w_pads]
    npads = [w.shape[1] for w in w_pads]
    kpad_in, npad_out = kpads[0], npads[-1]
    assert K <= kpad_in and kpad_in % 128 == 0 and npad_out % 128 == 0
    for l in range(num_layers - 1):
        assert npads[l] == kpads[l + 1]

    # --- input: pad only the feature dim to a lane multiple (no copy at all
    #     when K is already lane-aligned; never a full (Mpad, Dpad) copy).
    if K == kpad_in:
        xp = x2d
    else:
        xp = jnp.zeros((M, kpad_in), x2d.dtype).at[:, :K].set(x2d)

    itemsize = jnp.dtype(mxu_dtype).itemsize
    weight_bytes = sum(k * n for k, n in zip(kpads, npads)) * itemsize
    bias_bytes = sum(npads) * 4

    # --- M tile: biggest that fits a conservative VMEM budget (safe within
    #     v7x's 64 MiB/TC).  Weights are grid-constant, so only the pipelined
    #     x/out tiles and the f32 intermediates scale with TM.
    tm_align = 16 if mxu_dtype == jnp.bfloat16 else 8   # bf16 sublane packing
    budget = 40 << 20
    tile_budget = max(budget - (weight_bytes + bias_bytes), 2 << 20)
    per_row_bytes = 4 * (2 * kpad_in + 2 * npad_out + sum(npads))
    tm_cap = max(tm_align, (tile_budget // per_row_bytes) // tm_align * tm_align)
    TM = min(2048, tm_cap, _round_up(M, tm_align))
    # v7x: for large M keep >=2 grid steps so "parallel" shards over both TCs.
    if M >= 1024 and TM * 2 > _round_up(M, tm_align):
        TM = max(tm_align, _round_up((M + 1) // 2, tm_align))
    grid_m = pl.cdiv(M, TM)   # last tile may run past M: OOB reads are garbage
    #                           rows whose (masked) writes never land -> safe.

    kernel = functools.partial(_fused_mlp_kernel, num_layers=num_layers,
                               activation=activation, mxu_dtype=mxu_dtype)

    # --- specs: x/out are pipelined per M-tile; weights/biases are full-extent,
    #     grid-constant and single-buffered.
    in_specs = [pl.BlockSpec((TM, kpad_in), lambda i: (i, 0))]
    args = [xp]
    for w, b in zip(w_pads, b_pads):
        in_specs.append(_resident_spec(w.shape, lambda i: (0, 0)))
        in_specs.append(_resident_spec(b.shape, lambda i: (0, 0)))
        args += [w, b]
    out_specs = pl.BlockSpec((TM, npad_out), lambda i: (i, 0))

    # --- explicit scoped-VMEM budget (v5e default is only 16 MiB).
    needed = (weight_bytes + bias_bytes                     # single-buffered params
              + 2 * TM * (kpad_in + npad_out) * 4           # double-buffered x/out
              + TM * sum(npads) * 4)                        # f32 inter-layer acts
    vmem_limit = min(64 << 20, max(32 << 20, int(needed * 1.4) + (2 << 20)))

    flops = 2 * M * sum(k * n for k, n in zip(kpads, npads))
    transcendentals = M * sum(npads) if activation in ("sigmoid", "gelu") else 0
    bytes_accessed = 4 * M * kpad_in + weight_bytes + bias_bytes + 4 * M * npad_out

    # TODO(synk): if hidden sizes ever grow so the per-layer weights no longer
    # fit the VMEM budget, switch to a K-tiled grid axis with a VMEM
    # accumulator (pl.when init/finalize) instead of full-extent weight blocks.
    out = pl.pallas_call(
        kernel,
        out_shape=jax.ShapeDtypeStruct((M, npad_out), x2d.dtype),
        grid_spec=pl.GridSpec(
            grid=(grid_m,),
            in_specs=in_specs,
            out_specs=out_specs,
        ),
        compiler_params=pltpu.CompilerParams(
            dimension_semantics=("parallel",),
            vmem_limit_bytes=vmem_limit),
        cost_estimate=pl.CostEstimate(flops=flops,
                                      transcendentals=transcendentals,
                                      bytes_accessed=bytes_accessed),
    )(*args)

    return out if n_out == npad_out else out[:, :n_out]


class DNNPallas:
    """JAX/Pallas port of easy_tpp DNN (use_bn=False; dropout is identity in eval).

    Parameters are created deterministically from a PRNG key:
      - weights ~ Normal(0, init_std)                       (nn.init.normal_)
      - biases  ~ Uniform(-1/sqrt(fan_in), 1/sqrt(fan_in))   (torch Linear default)
    Weights are stored transposed, (in_dim, out_dim), so the kernel computes
    x @ W directly on the MXU.  `mxu_dtype` controls the MXU-input / stored
    weight dtype (bf16 default for v6e/v7x; use float32 for exact torch
    semantics and on v5e).
    """

    def __init__(self, inputs_dim, hidden_size, activation="relu",
                 init_std=1e-4, dropout_rate=0.0, use_bn=False, key=None,
                 mxu_dtype=jnp.bfloat16):
        if len(hidden_size) == 0:
            raise ValueError("hidden_units is empty!!")
        if use_bn:
            # TODO(synk): use_bn=True (BatchNorm1d before activation) not implemented.
            raise NotImplementedError("use_bn=True not supported")
        # TODO(synk): dropout_rate>0 training path not implemented
        # (module default is 0; dropout is identity in eval).
        self.activation = activation.lower() if isinstance(activation, str) else activation
        self.mxu_dtype = mxu_dtype

        dims = [inputs_dim] + list(hidden_size)
        key = key if key is not None else jax.random.PRNGKey(0)
        self.weights, self.biases = [], []
        for i in range(len(dims) - 1):
            key, kw, kb = jax.random.split(key, 3)
            fan_in, fan_out = dims[i], dims[i + 1]
            w = init_std * jax.random.normal(kw, (fan_in, fan_out), jnp.float32)
            bound = 1.0 / math.sqrt(fan_in)
            b = jax.random.uniform(kb, (fan_out,), jnp.float32,
                                   minval=-bound, maxval=bound)
            self.weights.append(w)
            self.biases.append(b)

        # Per-layer, lane-dense padded parameters for the fused kernel.
        # CORRECTNESS INVARIANT: the padded rows/cols of every weight must be
        # EXACTLY zero so that act(0) values living in padded columns (e.g. 0.5
        # for sigmoid) never leak into real features of the next layer.  Any
        # future "load external weights" path must write into freshly zeroed
        # buffers exactly like below.
        self.w_pads, self.b_pads = [], []
        for w, b in zip(self.weights, self.biases):
            kpad = _round_up(w.shape[0], 128)
            npad = _round_up(w.shape[1], 128)
            wp = jnp.zeros((kpad, npad), mxu_dtype).at[:w.shape[0], :w.shape[1]].set(
                w.astype(mxu_dtype))
            bp = jnp.zeros((1, npad), jnp.float32).at[0, :b.shape[0]].set(b)
            self.w_pads.append(wp)
            self.b_pads.append(bp)
        self.n_out = dims[-1]

    def __call__(self, inputs):
        # inputs: (batch, ..., inputs_dim) — flatten leading dims for the kernel
        lead_shape = inputs.shape[:-1]
        x2d = inputs.reshape(-1, inputs.shape[-1])
        out = fused_mlp_pallas(x2d, self.w_pads, self.b_pads,
                               self.activation, self.n_out,
                               mxu_dtype=self.mxu_dtype)
        return out.reshape(*lead_shape, self.n_out)


if __name__ == "__main__":
    key = jax.random.PRNGKey(0)
    k_in, k_in2, k_p1, k_p2, k_p3 = jax.random.split(key, 5)

    batch, seq, inputs_dim = 2, 8, 32
    hidden_size = [64, 32]
    x = jax.random.normal(k_in, (batch, seq, inputs_dim), jnp.float32)

    def ref_forward(model, x3d, activation):
        h = x3d.reshape(-1, x3d.shape[-1])
        for w, b in zip(model.weights, model.biases):
            h = h @ w + b
            if activation == "relu":
                h = jnp.maximum(h, 0.0)
            elif activation == "sigmoid":
                h = jax.nn.sigmoid(h)
            elif activation == "gelu":
                h = 0.5 * h * (1.0 + jnp.tanh(math.sqrt(2.0 / math.pi)
                                              * (h + 0.044715 * h ** 3)))
            elif activation == "linear":
                pass
        return h.reshape(*x3d.shape[:-1], model.n_out)

    # --- exact f32 MXU path: relu / gelu / sigmoid (sigmoid also exercises the
    #     zero-padded-weight-row invariant, since act(0) = 0.5 in padded cols).
    for act, kp in (("relu", k_p1), ("gelu", k_p2), ("sigmoid", k_p3)):
        model = DNNPallas(inputs_dim, hidden_size, activation=act, key=kp,
                          mxu_dtype=jnp.float32)
        out = jax.block_until_ready(model(x))
        ref = ref_forward(model, x, act)
        assert out.shape == (batch, seq, hidden_size[-1])
        assert jnp.allclose(out, ref, atol=1e-5, rtol=1e-5), act

    # --- default bf16 MXU path (f32 accumulation): looser tolerance vs f32 ref.
    model_bf = DNNPallas(inputs_dim, hidden_size, activation="gelu", key=k_p2)
    out_bf = jax.block_until_ready(model_bf(x))
    ref_bf = ref_forward(model_bf, x, "gelu")
    assert out_bf.shape == (batch, seq, hidden_size[-1])
    assert jnp.allclose(out_bf, ref_bf, atol=2e-2, rtol=2e-2)

    # --- M not a multiple of the tile: cdiv grid with a masked last tile.
    x_odd = jax.random.normal(k_in2, (3, 5, inputs_dim), jnp.float32)
    model_o = DNNPallas(inputs_dim, hidden_size, activation="relu", key=k_p1,
                        mxu_dtype=jnp.float32)
    out_o = jax.block_until_ready(model_o(x_odd))
    ref_o = ref_forward(model_o, x_odd, "relu")
    assert out_o.shape == (3, 5, hidden_size[-1])
    assert jnp.allclose(out_o, ref_o, atol=1e-5, rtol=1e-5)

    print("KERNEL_OK")
</pallas_src>

<mosaic_0001>
module attributes {stable_mosaic.version = 11 : i64} {
  func.func @_fused_mlp_kernel(%arg0: i32, %arg1: memref<16x128xf32, #tpu.memory_space<vmem>>, %arg2: memref<128x128xf32, #tpu.memory_space<vmem>>, %arg3: memref<1x128xf32, #tpu.memory_space<vmem>>, %arg4: memref<128x128xf32, #tpu.memory_space<vmem>>, %arg5: memref<1x128xf32, #tpu.memory_space<vmem>>, %arg6: memref<16x128xf32, #tpu.memory_space<vmem>>) attributes {dimension_semantics = [#tpu.dimension_semantics<parallel>], iteration_bounds = array<i64: 1>, scalar_prefetch = 0 : i64, scratch_operands = 0 : i64, tpu.core_type = #tpu.core_type<tc>, window_params = [{transform_indices = @transform_0, window_bounds = array<i64: 16, 128>}, {pipeline_mode = #tpu.pipeline_mode<synchronous>, transform_indices = @transform_1, window_bounds = array<i64: 128, 128>}, {pipeline_mode = #tpu.pipeline_mode<synchronous>, transform_indices = @transform_2, window_bounds = array<i64: 1, 128>}, {pipeline_mode = #tpu.pipeline_mode<synchronous>, transform_indices = @transform_3, window_bounds = array<i64: 128, 128>}, {pipeline_mode = #tpu.pipeline_mode<synchronous>, transform_indices = @transform_4, window_bounds = array<i64: 1, 128>}, {transform_indices = @transform_5, window_bounds = array<i64: 16, 128>}]} {
    %c0 = arith.constant 0 : index
    %c0_0 = arith.constant 0 : index
    %0 = vector.load %arg1[%c0, %c0_0] : memref<16x128xf32, #tpu.memory_space<vmem>>, vector<16x128xf32>
    %c0_1 = arith.constant 0 : index
    %c0_2 = arith.constant 0 : index
    %1 = vector.load %arg2[%c0_1, %c0_2] : memref<128x128xf32, #tpu.memory_space<vmem>>, vector<128x128xf32>
    %cst = arith.constant dense<0.000000e+00> : vector<16x128xf32>
    %2 = tpu.matmul %0, %1, %cst {dimension_numbers = #tpu.dot_dimension_numbers<[1], [0], [0], [1], [0, 0, 1, 1], [], []>} : vector<16x128xf32>, vector<128x128xf32>, vector<16x128xf32> -> vector<16x128xf32>
    %c0_3 = arith.constant 0 : index
    %c0_4 = arith.constant 0 : index
    %3 = vector.load %arg3[%c0_3, %c0_4] : memref<1x128xf32, #tpu.memory_space<vmem>>, vector<1x128xf32>
    %4 = vector.broadcast %3 : vector<1x128xf32> to vector<16x128xf32>
    %5 = arith.addf %2, %4 : vector<16x128xf32>
    %cst_5 = arith.constant 0.000000e+00 : f32
    %6 = vector.broadcast %cst_5 : f32 to vector<16x128xf32>
    %7 = arith.maximumf %5, %6 : vector<16x128xf32>
    %c0_6 = arith.constant 0 : index
    %c0_7 = arith.constant 0 : index
    %8 = vector.load %arg4[%c0_6, %c0_7] : memref<128x128xf32, #tpu.memory_space<vmem>>, vector<128x128xf32>
    %cst_8 = arith.constant dense<0.000000e+00> : vector<16x128xf32>
    %9 = tpu.matmul %7, %8, %cst_8 {dimension_numbers = #tpu.dot_dimension_numbers<[1], [0], [0], [1], [0, 0, 1, 1], [], []>} : vector<16x128xf32>, vector<128x128xf32>, vector<16x128xf32> -> vector<16x128xf32>
    %c0_9 = arith.constant 0 : index
    %c0_10 = arith.constant 0 : index
    %10 = vector.load %arg5[%c0_9, %c0_10] : memref<1x128xf32, #tpu.memory_space<vmem>>, vector<1x128xf32>
    %11 = vector.broadcast %10 : vector<1x128xf32> to vector<16x128xf32>
    %12 = arith.addf %9, %11 : vector<16x128xf32>
    %cst_11 = arith.constant 0.000000e+00 : f32
    %13 = vector.broadcast %cst_11 : f32 to vector<16x128xf32>
    %14 = arith.maximumf %12, %13 : vector<16x128xf32>
    %c0_12 = arith.constant 0 : index
    %c0_13 = arith.constant 0 : index
    %15 = vector.load %arg6[%c0_12, %c0_13] : memref<16x128xf32, #tpu.memory_space<vmem>>, vector<16x128xf32>
    tpu.vector_store %arg6[%c0_12, %c0_13], %14 {strides = array<i32>} : memref<16x128xf32, #tpu.memory_space<vmem>>, vector<16x128xf32>,
    return
  }
  func.func @transform_0(%arg0: i32) -> (i32, i32) {
    %c0_i32 = arith.constant 0 : i32
    %c0_i32_0 = arith.constant 0 : i32
    return %arg0, %c0_i32 : i32, i32
  }
  func.func @transform_1(%arg0: i32) -> (i32, i32) {
    %c0_i32 = arith.constant 0 : i32
    %c0_i32_0 = arith.constant 0 : i32
    %c0_i32_1 = arith.constant 0 : i32
    return %c0_i32, %c0_i32_0 : i32, i32
  }
  func.func @transform_2(%arg0: i32) -> (i32, i32) {
    %c0_i32 = arith.constant 0 : i32
    %c0_i32_0 = arith.constant 0 : i32
    %c0_i32_1 = arith.constant 0 : i32
    return %c0_i32, %c0_i32_0 : i32, i32
  }
  func.func @transform_3(%arg0: i32) -> (i32, i32) {
    %c0_i32 = arith.constant 0 : i32
    %c0_i32_0 = arith.constant 0 : i32
    %c0_i32_1 = arith.constant 0 : i32
    return %c0_i32, %c0_i32_0 : i32, i32
  }
  func.func @transform_4(%arg0: i32) -> (i32, i32) {
    %c0_i32 = arith.constant 0 : i32
    %c0_i32_0 = arith.constant 0 : i32
    %c0_i32_1 = arith.constant 0 : i32
    return %c0_i32, %c0_i32_0 : i32, i32
  }
  func.func @transform_5(%arg0: i32) -> (i32, i32) {
    %c0_i32 = arith.constant 0 : i32
    %c0_i32_0 = arith.constant 0 : i32
    return %arg0, %c0_i32 : i32, i32
  }
}

</mosaic_0001>

<llo_original>
// kernel: tpu_custom_call.1
$region0: #{tpu_custom_call.1}
  #allocation0 [shape = 'u32[]', space=smem, size = 0x4, offset = 0x4, fixed_abs, tag = 'smem constant byte address 0x4 - core index']
  #allocation1 [shape = 'u32[144,128]{1,0:T(1,128)}', space=vmem, size = 0x12000, scoped, tag = 'internal scratch']
  %s0 = inlined_call_operand.hbm [shape: f32[16,128], index: 0, kind: input, shape index: {}]
  %s1 = inlined_call_operand.hbm [shape: f32[128,128], index: 1, kind: input, shape index: {}]
  %s2 = inlined_call_operand.vmem [shape: f32[1,128], index: 2, kind: input, shape index: {}]
  %s3 = inlined_call_operand.hbm [shape: f32[128,128], index: 3, kind: input, shape index: {}]
  %s4 = inlined_call_operand.vmem [shape: f32[1,128], index: 4, kind: input, shape index: {}]
  %s5 = inlined_call_operand.hbm [shape: f32[16,128], index: 5, kind: output, shape index: {}]
  %s6 = sld [smem:[#allocation0]]
  $region42: #{tpu_custom_call.1} parent=0
    _
  %s8 = ssub.s32 1, %s6
  %s9 = scalar_select 0, %s8, %s6
  $region1: #{tpu_custom_call.1} parent=0
    #allocation2 [shape = 'u8[8192]{0}', space=vmem, size = 0x2000, scoped, tag = 'input window, operand 0, single buffered']
    #allocation3 [shape = 's32[1]{0}', space=sflag, size = 0x4, scoped, tag = 'scoped memory for tpu_custom_call.1']
    #allocation4 [shape = 's32[1]{0}', space=sflag, size = 0x4, scoped, tag = 'scoped memory for tpu_custom_call.1']
    #allocation5 [shape = 'u8[65536]{0}', space=vmem, size = 0x10000, scoped, tag = 'input window, operand 1, single buffered']
    #allocation6 [shape = 's32[1]{0}', space=sflag, size = 0x4, scoped, tag = 'scoped memory for tpu_custom_call.1']
    #allocation7 [shape = 'u8[65536]{0}', space=vmem, size = 0x10000, scoped, tag = 'input window, operand 3, single buffered']
    #allocation8 [shape = 'u8[8192]{0}', space=vmem, size = 0x2000, scoped, tag = 'output window, operand 0, single buffered']
    %10 = vsyncpa [#allocation3], 0
    %11 = vsyncpa [#allocation6], 0
    %12 = vsyncpa [#allocation4], 0
    // Predicated region
    $region2: #{tpu_custom_call.1} parent=1 // pred_check
      _
    $region3: #{tpu_custom_call.1} parent=1 // pred_check_branch
      %14 = sbr.rel (0) target = $region5
    $region4: #{tpu_custom_call.1} parent=1 // pred_region
      %s16 = ssub.s32 256, 256
      %17 = vsyncadd [#allocation3], %s16
      %s18 = sshll.u32 [#allocation2], 4
      %s19 = int_to_ptr.vmem [resolvable:$true] %s18
      %24 = dma.hbm_to_vmem [thread:$0]  %s0, 256, %s19, [#allocation3], 128, 128, 8
    $region5: #{tpu_custom_call.1} parent=1 // pred_fallthru
      _
    // Predicated region
    $region6: #{tpu_custom_call.1} parent=1 // pred_check
      _
    $region7: #{tpu_custom_call.1} parent=1 // pred_check_branch
      %26 = sbr.rel (0) target = $region9
    $region8: #{tpu_custom_call.1} parent=1 // pred_region
      %s28 = ssub.s32 2048, 2048
      %29 = vsyncadd [#allocation6], %s28
      %s30 = sshll.u32 [#allocation5], 4
      %s31 = int_to_ptr.vmem [resolvable:$true] %s30
      %36 = dma.hbm_to_vmem [thread:$0]  %s1, 2048, %s31, [#allocation6], 128, 128, 8
    $region9: #{tpu_custom_call.1} parent=1 // pred_fallthru
      _
    // Predicated region
    $region10: #{tpu_custom_call.1} parent=1 // pred_check
      _
    $region11: #{tpu_custom_call.1} parent=1 // pred_check_branch
      %38 = sbr.rel (0) target = $region13
    $region12: #{tpu_custom_call.1} parent=1 // pred_region
      _
    $region13: #{tpu_custom_call.1} parent=1 // pred_fallthru
      _
    // Predicated region
    $region14: #{tpu_custom_call.1} parent=1 // pred_check
      _
    $region15: #{tpu_custom_call.1} parent=1 // pred_check_branch
      %40 = sbr.rel (0) target = $region17
    $region16: #{tpu_custom_call.1} parent=1 // pred_region
      %s42 = ssub.s32 2048, 2048
      %43 = vsyncadd [#allocation6], %s42
      %s44 = sshll.u32 [#allocation7], 4
      %s45 = int_to_ptr.vmem [resolvable:$true] %s44
      %50 = dma.hbm_to_vmem [thread:$0]  %s3, 2048, %s45, [#allocation6], 128, 128, 8
    $region17: #{tpu_custom_call.1} parent=1 // pred_fallthru
      _
    // Predicated region
    $region18: #{tpu_custom_call.1} parent=1 // pred_check
      _
    $region19: #{tpu_custom_call.1} parent=1 // pred_check_branch
      %52 = sbr.rel (0) target = $region21
    $region20: #{tpu_custom_call.1} parent=1 // pred_region
      _
    $region21: #{tpu_custom_call.1} parent=1 // pred_fallthru
      _
    // Predicated region
    $region22: #{tpu_custom_call.1} parent=1 // pred_check
      _
    $region23: #{tpu_custom_call.1} parent=1 // pred_check_branch
      %54 = sbr.rel (0) target = $region25
    $region24: #{tpu_custom_call.1} parent=1 // pred_region
      %55 = dma.done [#allocation3], 256
    $region25: #{tpu_custom_call.1} parent=1 // pred_fallthru
      _
    // Predicated region
    $region26: #{tpu_custom_call.1} parent=1 // pred_check
      _
    $region27: #{tpu_custom_call.1} parent=1 // pred_check_branch
      %57 = sbr.rel (0) target = $region29
    $region28: #{tpu_custom_call.1} parent=1 // pred_region
      %58 = dma.done [#allocation6], 2048
    $region29: #{tpu_custom_call.1} parent=1 // pred_fallthru
      _
    // Predicated region
    $region30: #{tpu_custom_call.1} parent=1 // pred_check
      _
    $region31: #{tpu_custom_call.1} parent=1 // pred_check_branch
      %60 = sbr.rel (0) target = $region33
    $region32: #{tpu_custom_call.1} parent=1 // pred_region
      %61 = dma.done [#allocation6], 2048
    $region33: #{tpu_custom_call.1} parent=1 // pred_fallthru
      _
    %v62 = vld [vmem:[#allocation2] sm:$0xff]
    %v63 = vld [vmem:[#allocation2 + $0x8] sm:$0xff]
    %v64 = vld [vmem:[#allocation5] sm:$0xff]
    %v65 = vld [vmem:[#allocation5 + $0x8] sm:$0xff]
    %v66 = vld [vmem:[#allocation5 + $0x10] sm:$0xff]
    %v67 = vld [vmem:[#allocation5 + $0x18] sm:$0xff]
    %v68 = vld [vmem:[#allocation5 + $0x20] sm:$0xff]
    %v69 = vld [vmem:[#allocation5 + $0x28] sm:$0xff]
    %v70 = vld [vmem:[#allocation5 + $0x30] sm:$0xff]
    %v71 = vld [vmem:[#allocation5 + $0x38] sm:$0xff]
    %v72 = vld [vmem:[#allocation5 + $0x40] sm:$0xff]
    %v73 = vld [vmem:[#allocation5 + $0x48] sm:$0xff]
    %v74 = vld [vmem:[#allocation5 + $0x50] sm:$0xff]
    %v75 = vld [vmem:[#allocation5 + $0x58] sm:$0xff]
    %v76 = vld [vmem:[#allocation5 + $0x60] sm:$0xff]
    %v77 = vld [vmem:[#allocation5 + $0x68] sm:$0xff]
    %v78 = vld [vmem:[#allocation5 + $0x70] sm:$0xff]
    %v79 = vld [vmem:[#allocation5 + $0x78] sm:$0xff]
    %v80 = vld [vmem:[%s2] sm:$0x1]
    %v82 = vlaneseq
    %v83 = vshrl.u32 %v82, 7
    %v84 = vsub.s32 0, %v83
    %v85 = vrot.slane %v80, %v84
    %87 = vmatprep.subr.mxu0 0.0
    %88 = vmatpush1.msra.mxu0 %v79
    %89 = vmatprep.subr.mxu0 0.0
    %90 = vmatpush1.msra.mxu0 %v78
    %91 = vmatprep.subr.mxu0 0.0
    %92 = vmatpush1.msra.mxu0 %v77
    %93 = vmatprep.subr.mxu0 0.0
    %94 = vmatpush1.msra.mxu0 %v76
    %95 = vmatprep.subr.mxu0 0.0
    %96 = vmatpush1.msra.mxu0 %v75
    %97 = vmatprep.subr.mxu0 0.0
    %98 = vmatpush1.msra.mxu0 %v74
    %99 = vmatprep.subr.mxu0 0.0
    %100 = vmatpush1.msra.mxu0 %v73
    %101 = vmatprep.subr.mxu0 0.0
    %102 = vmatpush1.msra.mxu0 %v72
    %103 = vmatprep.subr.mxu0 0.0
    %104 = vmatpush1.msra.mxu0 %v71
    %105 = vmatprep.subr.mxu0 0.0
    %106 = vmatpush1.msra.mxu0 %v70
    %107 = vmatprep.subr.mxu0 0.0
    %108 = vmatpush1.msra.mxu0 %v69
    %109 = vmatprep.subr.mxu0 0.0
    %110 = vmatpush1.msra.mxu0 %v68
    %111 = vmatprep.subr.mxu0 0.0
    %112 = vmatpush1.msra.mxu0 %v67
    %113 = vmatprep.subr.mxu0 0.0
    %114 = vmatpush1.msra.mxu0 %v66
    %115 = vmatprep.subr.mxu0 0.0
    %116 = vmatpush1.msra.mxu0 %v65
    %117 = vmatprep.subr.mxu0 0.0
    %118 = vmatpush1.msra.mxu0 %v64
    %119 = vmatprep.subr.mxu0 0.0
    %120 = vmatpush2.msra.mxu0 0.0
    %121 = vmatprep.subr.mxu0 0.0
    %122 = vmatpush2.msra.mxu0 0.0
    %123 = vmatprep.subr.mxu0 0.0
    %124 = vmatpush2.msra.mxu0 0.0
    %125 = vmatprep.subr.mxu0 0.0
    %126 = vmatpush2.msra.mxu0 0.0
    %127 = vmatprep.subr.mxu0 0.0
    %128 = vmatpush2.msra.mxu0 0.0
    %129 = vmatprep.subr.mxu0 0.0
    %130 = vmatpush2.msra.mxu0 0.0
    %131 = vmatprep.subr.mxu0 0.0
    %132 = vmatpush2.msra.mxu0 0.0
    %133 = vmatprep.subr.mxu0 0.0
    %134 = vmatpush2.msra.mxu0 0.0
    %135 = vmatprep.subr.mxu0 0.0
    %136 = vmatpush2.msra.mxu0 0.0
    %137 = vmatprep.subr.mxu0 0.0
    %138 = vmatpush2.msra.mxu0 0.0
    %139 = vmatprep.subr.mxu0 0.0
    %140 = vmatpush2.msra.mxu0 0.0
    %141 = vmatprep.subr.mxu0 0.0
    %142 = vmatpush2.msra.mxu0 0.0
    %143 = vmatprep.subr.mxu0 0.0
    %144 = vmatpush2.msra.mxu0 0.0
    %145 = vmatprep.subr.mxu0 0.0
    %146 = vmatpush2.msra.mxu0 0.0
    %147 = vmatprep.subr.mxu0 0.0
    %148 = vmatpush2.msra.mxu0 0.0
    %149 = vmatprep.subr.mxu0 0.0
    %150 = vmatpush2.msra.mxu0 0.0
    %151 = vmatprep.mubr.f32.mxu0 0.0
    %152 = vmatmul.mubr.f32.gmra.mxu0 %v62
    %v153 = vpop.f32.mrf.mxu0
    %v154 = vadd.f32 %v85, %v153
    %v155 = vpop.f32.mrf.mxu0
    %156 = vmatprep.mubr.f32.mxu0 0.0
    %157 = vmatmul.mubr.f32.gmra.mxu0 %v63
    %v158 = vpop.f32.mrf.mxu0
    %v159 = vadd.f32 %v85, %v158
    %v160 = vpop.f32.mrf.mxu0
    %161 = vdwg.mxu0
    %v162 = vmax.f32 %v154, 0.0
    %v163 = vmax.f32 %v159, 0.0
    %v164 = vld [vmem:[#allocation7] sm:$0xff]
    %v165 = vld [vmem:[#allocation7 + $0x8] sm:$0xff]
    %v166 = vld [vmem:[#allocation7 + $0x10] sm:$0xff]
    %v167 = vld [vmem:[#allocation7 + $0x18] sm:$0xff]
    %v168 = vld [vmem:[#allocation7 + $0x20] sm:$0xff]
    %v169 = vld [vmem:[#allocation7 + $0x28] sm:$0xff]
    %v170 = vld [vmem:[#allocation7 + $0x30] sm:$0xff]
    %v171 = vld [vmem:[#allocation7 + $0x38] sm:$0xff]
    %v172 = vld [vmem:[#allocation7 + $0x40] sm:$0xff]
    %v173 = vld [vmem:[#allocation7 + $0x48] sm:$0xff]
    %v174 = vld [vmem:[#allocation7 + $0x50] sm:$0xff]
    %v175 = vld [vmem:[#allocation7 + $0x58] sm:$0xff]
    %v176 = vld [vmem:[#allocation7 + $0x60] sm:$0xff]
    %v177 = vld [vmem:[#allocation7 + $0x68] sm:$0xff]
    %v178 = vld [vmem:[#allocation7 + $0x70] sm:$0xff]
    %v179 = vld [vmem:[#allocation7 + $0x78] sm:$0xff]
    %v180 = vld [vmem:[%s4] sm:$0x1]
    %v182 = vlaneseq
    %v183 = vshrl.u32 %v182, 7
    %v184 = vsub.s32 0, %v183
    %v185 = vrot.slane %v180, %v184
    %187 = vmatprep.subr.mxu0 0.0
    %188 = vmatpush1.msra.mxu0 %v179
    %189 = vmatprep.subr.mxu0 0.0
    %190 = vmatpush1.msra.mxu0 %v178
    %191 = vmatprep.subr.mxu0 0.0
    %192 = vmatpush1.msra.mxu0 %v177
    %193 = vmatprep.subr.mxu0 0.0
    %194 = vmatpush1.msra.mxu0 %v176
    %195 = vmatprep.subr.mxu0 0.0
    %196 = vmatpush1.msra.mxu0 %v175
    %197 = vmatprep.subr.mxu0 0.0
    %198 = vmatpush1.msra.mxu0 %v174
    %199 = vmatprep.subr.mxu0 0.0
    %200 = vmatpush1.msra.mxu0 %v173
    %201 = vmatprep.subr.mxu0 0.0
    %202 = vmatpush1.msra.mxu0 %v172
    %203 = vmatprep.subr.mxu0 0.0
    %204 = vmatpush1.msra.mxu0 %v171
    %205 = vmatprep.subr.mxu0 0.0
    %206 = vmatpush1.msra.mxu0 %v170
    %207 = vmatprep.subr.mxu0 0.0
    %208 = vmatpush1.msra.mxu0 %v169
    %209 = vmatprep.subr.mxu0 0.0
    %210 = vmatpush1.msra.mxu0 %v168
    %211 = vmatprep.subr.mxu0 0.0
    %212 = vmatpush1.msra.mxu0 %v167
    %213 = vmatprep.subr.mxu0 0.0
    %214 = vmatpush1.msra.mxu0 %v166
    %215 = vmatprep.subr.mxu0 0.0
    %216 = vmatpush1.msra.mxu0 %v165
    %217 = vmatprep.subr.mxu0 0.0
    %218 = vmatpush1.msra.mxu0 %v164
    %219 = vmatprep.subr.mxu0 0.0
    %220 = vmatpush2.msra.mxu0 0.0
    %221 = vmatprep.subr.mxu0 0.0
    %222 = vmatpush2.msra.mxu0 0.0
    %223 = vmatprep.subr.mxu0 0.0
    %224 = vmatpush2.msra.mxu0 0.0
    %225 = vmatprep.subr.mxu0 0.0
    %226 = vmatpush2.msra.mxu0 0.0
    %227 = vmatprep.subr.mxu0 0.0
    %228 = vmatpush2.msra.mxu0 0.0
    %229 = vmatprep.subr.mxu0 0.0
    %230 = vmatpush2.msra.mxu0 0.0
    %231 = vmatprep.subr.mxu0 0.0
    %232 = vmatpush2.msra.mxu0 0.0
    %233 = vmatprep.subr.mxu0 0.0
    %234 = vmatpush2.msra.mxu0 0.0
    %235 = vmatprep.subr.mxu0 0.0
    %236 = vmatpush2.msra.mxu0 0.0
    %237 = vmatprep.subr.mxu0 0.0
    %238 = vmatpush2.msra.mxu0 0.0
    %239 = vmatprep.subr.mxu0 0.0
    %240 = vmatpush2.msra.mxu0 0.0
    %241 = vmatprep.subr.mxu0 0.0
    %242 = vmatpush2.msra.mxu0 0.0
    %243 = vmatprep.subr.mxu0 0.0
    %244 = vmatpush2.msra.mxu0 0.0
    %245 = vmatprep.subr.mxu0 0.0
    %246 = vmatpush2.msra.mxu0 0.0
    %247 = vmatprep.subr.mxu0 0.0
    %248 = vmatpush2.msra.mxu0 0.0
    %249 = vmatprep.subr.mxu0 0.0
    %250 = vmatpush2.msra.mxu0 0.0
    %251 = vmatprep.mubr.f32.mxu0 0.0
    %252 = vmatmul.mubr.f32.gmra.mxu0 %v162
    %v253 = vpop.f32.mrf.mxu0
    %v254 = vadd.f32 %v185, %v253
    %v255 = vpop.f32.mrf.mxu0
    %256 = vmatprep.mubr.f32.mxu0 0.0
    %257 = vmatmul.mubr.f32.gmra.mxu0 %v163
    %v258 = vpop.f32.mrf.mxu0
    %v259 = vadd.f32 %v185, %v258
    %v260 = vpop.f32.mrf.mxu0
    %261 = vdwg.mxu0
    %v262 = vmax.f32 %v254, 0.0
    %v263 = vmax.f32 %v259, 0.0
    %264 = vst [vmem:[#allocation8] sm:$0xff] %v262
    %265 = vst [vmem:[#allocation8 + $0x8] sm:$0xff] %v263
    // Predicated region
    $region34: #{tpu_custom_call.1} parent=1 // pred_check
      _
    $region35: #{tpu_custom_call.1} parent=1 // pred_check_branch
      %267 = sbr.rel (0) target = $region37
    $region36: #{tpu_custom_call.1} parent=1 // pred_region
      %s269 = ssub.s32 256, 256
      %270 = vsyncadd [#allocation4], %s269
      %s271 = sshll.u32 [#allocation8], 4
      %s272 = int_to_ptr.vmem [resolvable:$true] %s271
      %277 = dma.vmem_to_hbm [thread:$0]  %s272, 256, %s5, [#allocation4], 128, 128, 8
    $region37: #{tpu_custom_call.1} parent=1 // pred_fallthru
      _
    // Predicated region
    $region38: #{tpu_custom_call.1} parent=1 // pred_check
      _
    $region39: #{tpu_custom_call.1} parent=1 // pred_check_branch
      %279 = sbr.rel (0) target = $region41
    $region40: #{tpu_custom_call.1} parent=1 // pred_region
      %280 = dma.done [#allocation4], 256
    $region41: #{tpu_custom_call.1} parent=1 // pred_fallthru
      _
    %281 = vsyncpa [#allocation3], 1
    %282 = vsyncpa [#allocation6], 1
    %283 = vsyncpa [#allocation4], 1

</llo_original>
